<compile_context>
chip_gen: v6e
topology: v6e:2x2x1
jax: 0.10.0
libtpu: 0.0.40
codegen_flags: <defaults>
</compile_context>

<pallas_src>
import functools

import jax
import jax.numpy as jnp
from jax.experimental import pallas as pl
from jax.experimental.pallas import tpu as pltpu


def _round_up(x: int, m: int) -> int:
    return (x + m - 1) // m * m


def _fused_mlp_kernel(x_ref, w_ref, b_ref, o_ref, *, num_layers: int):
    """Fused MLP on one (TM, P) activation tile.

    x_ref: (TM, P) f32   w_ref: (L, P, P) bf16   b_ref: (L, 1, P) f32
    o_ref: (TM, P) f32
    """
    h = x_ref[...].astype(jnp.float32)
    for layer in range(num_layers):
        # bf16 operands, f32 accumulation on the MXU.
        y = jnp.dot(h.astype(jnp.bfloat16), w_ref[layer],
                    preferred_element_type=jnp.float32)
        y = y + b_ref[layer]            # (1, P) broadcasts over rows
        if layer < num_layers - 1:
            y = jnp.maximum(y, 0.0)     # VPU filler; hidden under DMA anyway
        h = y
    o_ref[...] = h.astype(o_ref.dtype)


def pack_mlp_params(params, weight_dtype=jnp.bfloat16):
    """Zero-pad every layer's (in,out) weight/bias to a common (P, P)/(1, P),
    stack, and cast weights to bf16. Call ONCE at init, not per forward.

    P = round_up(max(all dims), 128) — for the real deformable-POTR config
    (hidden_dim=256) this lands exactly on the v6e/v7x 256x256 MXU tile.
    """
    dims = [params[0][0].shape[0]] + [w_t.shape[1] for (w_t, _) in params]
    pad_dim = _round_up(max(dims), 128)
    num_layers = len(params)
    w_stack = jnp.zeros((num_layers, pad_dim, pad_dim), jnp.float32)
    b_stack = jnp.zeros((num_layers, 1, pad_dim), jnp.float32)
    for layer, (w_t, b) in enumerate(params):
        k, n = w_t.shape
        w_stack = w_stack.at[layer, :k, :n].set(w_t)
        b_stack = b_stack.at[layer, 0, :n].set(b)
    return w_stack.astype(weight_dtype), b_stack, pad_dim


def mlp_forward(x, w_stack, b_stack, out_dim, *, tm_max: int = 1024):
    """x: (..., input_dim) -> (..., output_dim). Matches MLP.forward exactly
    (up to bf16 matmul rounding; accumulation is f32)."""
    orig_shape = x.shape
    in_dim = orig_shape[-1]
    num_layers, pad_dim, _ = w_stack.shape

    x2d = x.reshape(-1, in_dim)
    m_rows = x2d.shape[0]

    # Feature-dim zero-fill only when needed. Correctness note: padded input
    # columns MUST be exact zeros (zero weight rows then make them inert);
    # rows are never padded — the boundary block handles ragged M.
    if in_dim != pad_dim:
        x2d = jnp.pad(x2d, ((0, 0), (0, pad_dim - in_dim)))

    # Row tile: as big as tm_max for DMA efficiency, but guarantee >= 2 grid
    # steps whenever there is more than one 8-row sublane group so the
    # "parallel" grid axis can shard across v7x's two TensorCores.
    tm = min(tm_max, _round_up(m_rows, 8))
    if m_rows > 8 and pl.cdiv(m_rows, tm) < 2:
        tm = _round_up(pl.cdiv(m_rows, 2), 8)
    grid = (pl.cdiv(m_rows, tm),)

    itemsize = x2d.dtype.itemsize
    flops = 2 * m_rows * pad_dim * pad_dim * num_layers
    bytes_accessed = (2 * m_rows * pad_dim * itemsize          # x in + out
                      + w_stack.size * w_stack.dtype.itemsize  # bf16 weights
                      + b_stack.size * b_stack.dtype.itemsize)

    # Explicit scoped-VMEM budget: double-buffered x/out tiles + (up to)
    # double-buffered grid-invariant weight/bias stacks + margin.
    vmem_need = (2 * tm * pad_dim * itemsize * 2
                 + 2 * w_stack.size * w_stack.dtype.itemsize
                 + 2 * b_stack.size * b_stack.dtype.itemsize)
    vmem_limit = int(min(max(vmem_need + (4 << 20), 16 << 20), 64 << 20))

    out = pl.pallas_call(
        functools.partial(_fused_mlp_kernel, num_layers=num_layers),
        out_shape=jax.ShapeDtypeStruct((m_rows, pad_dim), x2d.dtype),
        grid=grid,
        in_specs=[
            pl.BlockSpec((tm, pad_dim), lambda i: (i, 0)),
            # Weights / biases: whole (small) arrays, grid-invariant block
            # index so they are DMA'd into VMEM once and reused across tiles.
            pl.BlockSpec((num_layers, pad_dim, pad_dim), lambda i: (0, 0, 0)),
            pl.BlockSpec((num_layers, 1, pad_dim), lambda i: (0, 0, 0)),
        ],
        out_specs=pl.BlockSpec((tm, pad_dim), lambda i: (i, 0)),
        compiler_params=pltpu.CompilerParams(
            dimension_semantics=("parallel",),   # shards M tiles across TCs
            vmem_limit_bytes=vmem_limit,
        ),
        cost_estimate=pl.CostEstimate(
            flops=flops, transcendentals=0, bytes_accessed=bytes_accessed),
    )(x2d, w_stack, b_stack)

    out2d = out[:, :out_dim] if out_dim != pad_dim else out
    return out2d.reshape(orig_shape[:-1] + (out_dim,))


def init_mlp_params(key, input_dim, hidden_dim, output_dim, num_layers):
    """Deterministic init matching nn.Linear default (uniform +/- 1/sqrt(fan_in))."""
    h = [hidden_dim] * (num_layers - 1)
    dims = list(zip([input_dim] + h, h + [output_dim]))
    params = []
    for (n_in, n_out) in dims:
        key, kw, kb = jax.random.split(key, 3)
        bound = 1.0 / (n_in ** 0.5)
        # PyTorch stores W as (out, in); we keep the transposed (in, out) copy.
        w_t = jax.random.uniform(kw, (n_in, n_out), jnp.float32, -bound, bound)
        b = jax.random.uniform(kb, (n_out,), jnp.float32, -bound, bound)
        params.append((w_t, b))
    return params


def mlp_reference(x, params):
    """Pure-JAX f32 reference of the PyTorch forward for validation."""
    num_layers = len(params)
    for i, (w_t, b) in enumerate(params):
        x = x @ w_t + b
        if i < num_layers - 1:
            x = jax.nn.relu(x)
    return x


if __name__ == "__main__":
    # Small shapes consistent with the module's usage in deformable POTR:
    # (batch, num_queries, hidden_dim) -> (batch, num_queries, output_dim)
    batch, seq = 2, 8
    input_dim, hidden_dim, output_dim, num_layers = 32, 32, 3, 3

    key = jax.random.PRNGKey(0)
    key, kx = jax.random.split(key)
    x = jax.random.normal(kx, (batch, seq, input_dim), jnp.float32)

    params = init_mlp_params(key, input_dim, hidden_dim, output_dim, num_layers)

    # Pack (pad + stack + bf16-cast) weights ONCE, outside the forward pass.
    w_stack, b_stack, _ = pack_mlp_params(params)

    out = mlp_forward(x, w_stack, b_stack, output_dim)
    out = jax.block_until_ready(out)

    ref = mlp_reference(x, params)
    assert out.shape == (batch, seq, output_dim), out.shape
    # bf16 matmul operands (f32 accumulation) => looser tolerance vs f32 ref.
    assert jnp.allclose(out, ref, atol=5e-2, rtol=5e-2), "mismatch vs reference"

    print("KERNEL_OK")
</pallas_src>

<mosaic_0001>
module attributes {stable_mosaic.version = 11 : i64} {
  func.func @_fused_mlp_kernel(%arg0: i32, %arg1: memref<8x128xf32, #tpu.memory_space<vmem>>, %arg2: memref<3x128x128xbf16, #tpu.memory_space<vmem>>, %arg3: memref<3x1x128xf32, #tpu.memory_space<vmem>>, %arg4: memref<8x128xf32, #tpu.memory_space<vmem>>) attributes {dimension_semantics = [#tpu.dimension_semantics<parallel>], iteration_bounds = array<i64: 2>, scalar_prefetch = 0 : i64, scratch_operands = 0 : i64, tpu.core_type = #tpu.core_type<tc>, window_params = [{transform_indices = @transform_0, window_bounds = array<i64: 8, 128>}, {pipeline_mode = #tpu.pipeline_mode<synchronous>, transform_indices = @transform_1, window_bounds = array<i64: 3, 128, 128>}, {pipeline_mode = #tpu.pipeline_mode<synchronous>, transform_indices = @transform_2, window_bounds = array<i64: 3, 1, 128>}, {transform_indices = @transform_3, window_bounds = array<i64: 8, 128>}]} {
    %c0 = arith.constant 0 : index
    %c0_0 = arith.constant 0 : index
    %0 = vector.load %arg1[%c0, %c0_0] : memref<8x128xf32, #tpu.memory_space<vmem>>, vector<8x128xf32>
    %1 = arith.truncf %0 : vector<8x128xf32> to vector<8x128xbf16>
    %c0_1 = arith.constant 0 : index
    %c0_2 = arith.constant 0 : index
    %c0_3 = arith.constant 0 : index
    %2 = vector.load %arg2[%c0_1, %c0_2, %c0_3] : memref<3x128x128xbf16, #tpu.memory_space<vmem>>, vector<1x128x128xbf16>
    %3 = vector.shape_cast %2 : vector<1x128x128xbf16> to vector<128x128xbf16>
    %cst = arith.constant dense<0.000000e+00> : vector<8x128xf32>
    %4 = tpu.matmul %1, %3, %cst {dimension_numbers = #tpu.dot_dimension_numbers<[1], [0], [0], [1], [0, 0, 1, 1], [], []>} : vector<8x128xbf16>, vector<128x128xbf16>, vector<8x128xf32> -> vector<8x128xf32>
    %c0_4 = arith.constant 0 : index
    %c0_5 = arith.constant 0 : index
    %c0_6 = arith.constant 0 : index
    %5 = vector.load %arg3[%c0_4, %c0_5, %c0_6] : memref<3x1x128xf32, #tpu.memory_space<vmem>>, vector<1x1x128xf32>
    %6 = vector.shape_cast %5 : vector<1x1x128xf32> to vector<1x128xf32>
    %7 = vector.broadcast %6 : vector<1x128xf32> to vector<8x128xf32>
    %8 = arith.addf %4, %7 : vector<8x128xf32>
    %cst_7 = arith.constant 0.000000e+00 : f32
    %9 = vector.broadcast %cst_7 : f32 to vector<8x128xf32>
    %10 = arith.maximumf %8, %9 : vector<8x128xf32>
    %11 = arith.truncf %10 : vector<8x128xf32> to vector<8x128xbf16>
    %c1 = arith.constant 1 : index
    %c0_8 = arith.constant 0 : index
    %c0_9 = arith.constant 0 : index
    %12 = vector.load %arg2[%c1, %c0_8, %c0_9] : memref<3x128x128xbf16, #tpu.memory_space<vmem>>, vector<1x128x128xbf16>
    %13 = vector.shape_cast %12 : vector<1x128x128xbf16> to vector<128x128xbf16>
    %cst_10 = arith.constant dense<0.000000e+00> : vector<8x128xf32>
    %14 = tpu.matmul %11, %13, %cst_10 {dimension_numbers = #tpu.dot_dimension_numbers<[1], [0], [0], [1], [0, 0, 1, 1], [], []>} : vector<8x128xbf16>, vector<128x128xbf16>, vector<8x128xf32> -> vector<8x128xf32>
    %c1_11 = arith.constant 1 : index
    %c0_12 = arith.constant 0 : index
    %c0_13 = arith.constant 0 : index
    %15 = vector.load %arg3[%c1_11, %c0_12, %c0_13] : memref<3x1x128xf32, #tpu.memory_space<vmem>>, vector<1x1x128xf32>
    %16 = vector.shape_cast %15 : vector<1x1x128xf32> to vector<1x128xf32>
    %17 = vector.broadcast %16 : vector<1x128xf32> to vector<8x128xf32>
    %18 = arith.addf %14, %17 : vector<8x128xf32>
    %cst_14 = arith.constant 0.000000e+00 : f32
    %19 = vector.broadcast %cst_14 : f32 to vector<8x128xf32>
    %20 = arith.maximumf %18, %19 : vector<8x128xf32>
    %21 = arith.truncf %20 : vector<8x128xf32> to vector<8x128xbf16>
    %c2 = arith.constant 2 : index
    %c0_15 = arith.constant 0 : index
    %c0_16 = arith.constant 0 : index
    %22 = vector.load %arg2[%c2, %c0_15, %c0_16] : memref<3x128x128xbf16, #tpu.memory_space<vmem>>, vector<1x128x128xbf16>
    %23 = vector.shape_cast %22 : vector<1x128x128xbf16> to vector<128x128xbf16>
    %cst_17 = arith.constant dense<0.000000e+00> : vector<8x128xf32>
    %24 = tpu.matmul %21, %23, %cst_17 {dimension_numbers = #tpu.dot_dimension_numbers<[1], [0], [0], [1], [0, 0, 1, 1], [], []>} : vector<8x128xbf16>, vector<128x128xbf16>, vector<8x128xf32> -> vector<8x128xf32>
    %c2_18 = arith.constant 2 : index
    %c0_19 = arith.constant 0 : index
    %c0_20 = arith.constant 0 : index
    %25 = vector.load %arg3[%c2_18, %c0_19, %c0_20] : memref<3x1x128xf32, #tpu.memory_space<vmem>>, vector<1x1x128xf32>
    %26 = vector.shape_cast %25 : vector<1x1x128xf32> to vector<1x128xf32>
    %27 = vector.broadcast %26 : vector<1x128xf32> to vector<8x128xf32>
    %28 = arith.addf %24, %27 : vector<8x128xf32>
    %c0_21 = arith.constant 0 : index
    %c0_22 = arith.constant 0 : index
    %29 = vector.load %arg4[%c0_21, %c0_22] : memref<8x128xf32, #tpu.memory_space<vmem>>, vector<8x128xf32>
    tpu.vector_store %arg4[%c0_21, %c0_22], %28 {strides = array<i32>} : memref<8x128xf32, #tpu.memory_space<vmem>>, vector<8x128xf32>,
    return
  }
  func.func @transform_0(%arg0: i32) -> (i32, i32) {
    %c0_i32 = arith.constant 0 : i32
    %c0_i32_0 = arith.constant 0 : i32
    return %arg0, %c0_i32 : i32, i32
  }
  func.func @transform_1(%arg0: i32) -> (i32, i32, i32) {
    %c0_i32 = arith.constant 0 : i32
    %c0_i32_0 = arith.constant 0 : i32
    %c0_i32_1 = arith.constant 0 : i32
    %c0_i32_2 = arith.constant 0 : i32
    return %c0_i32, %c0_i32_0, %c0_i32_1 : i32, i32, i32
  }
  func.func @transform_2(%arg0: i32) -> (i32, i32, i32) {
    %c0_i32 = arith.constant 0 : i32
    %c0_i32_0 = arith.constant 0 : i32
    %c0_i32_1 = arith.constant 0 : i32
    %c0_i32_2 = arith.constant 0 : i32
    return %c0_i32, %c0_i32_0, %c0_i32_1 : i32, i32, i32
  }
  func.func @transform_3(%arg0: i32) -> (i32, i32) {
    %c0_i32 = arith.constant 0 : i32
    %c0_i32_0 = arith.constant 0 : i32
    return %arg0, %c0_i32 : i32, i32
  }
}

</mosaic_0001>

<llo_original>
// kernel: tpu_custom_call.1
$region0: #{tpu_custom_call.1}
  #allocation0 [shape = 'u32[]', space=smem, size = 0x4, offset = 0x4, fixed_abs, tag = 'smem constant byte address 0x4 - core index']
  #allocation1 [shape = 'u32[144,128]{1,0:T(1,128)}', space=vmem, size = 0x12000, scoped, tag = 'internal scratch']
  %s0 = inlined_call_operand.hbm [shape: f32[16,128], index: 0, kind: input, shape index: {}]
  %s1 = inlined_call_operand.hbm [shape: bf16[3,128,128], index: 1, kind: input, shape index: {}]
  %s2 = inlined_call_operand.vmem [shape: f32[3,1,128], index: 2, kind: input, shape index: {}]
  %s3 = inlined_call_operand.hbm [shape: f32[16,128], index: 3, kind: output, shape index: {}]
  %s4 = sld [smem:[#allocation0]]
  $region53: #{tpu_custom_call.1} parent=0
    _
  %s6 = ssub.s32 1, %s4
  %s7 = scalar_select 0, %s6, %s4
  $region1: #{tpu_custom_call.1} parent=0
    #allocation2 [shape = 'u8[8192]{0}', space=vmem, size = 0x2000, scoped, tag = 'input window, operand 0']
    #allocation3 [shape = 's32[2]{0}', space=sflag, size = 0x8, scoped, tag = 'scoped memory for tpu_custom_call.1']
    #allocation4 [shape = 's32[2]{0}', space=sflag, size = 0x8, scoped, tag = 'scoped memory for tpu_custom_call.1']
    #allocation5 [shape = 'u8[98304]{0}', space=vmem, size = 0x18000, scoped, tag = 'input window, operand 1, single buffered']
    #allocation6 [shape = 's32[1]{0}', space=sflag, size = 0x4, scoped, tag = 'scoped memory for tpu_custom_call.1']
    #allocation7 [shape = 'u8[8192]{0}', space=vmem, size = 0x2000, scoped, tag = 'output window, operand 0']
    %8 = vsyncpa [#allocation3], 0
    %s9 = scalar_lea.sflag [#allocation3], 1
    %10 = vsyncpa %s9, 0
    %11 = vsyncpa [#allocation6], 0
    %12 = vsyncpa [#allocation4], 0
    %s13 = scalar_lea.sflag [#allocation4], 1
    %14 = vsyncpa %s13, 0
    loop: start=0, step=1, limit=4
    $region2: #{tpu_custom_call.1} parent=1 // loop_pre_header
      _
    $region3: #{tpu_custom_call.1} parent=1 // loop_header
      %s16 = sphi 0, %s20
      %p17 = scmp.ge.s32.totalorder %s16, 4
      %s26 = sphi 0, %s28
      %s29 = sphi 0, %s26
      %s30 = sphi 0, %s29
      %s46 = sphi 0, %s30
      %s50 = sphi 0, %s50
      %s52 = sphi 0, %s50
      %s53 = sphi 0, %s52
      %s67 = sphi 0, %s53
      %s71 = sphi 0, %s71
      %s73 = sphi 0, %s71
      %s74 = sphi 0, %s73
      %s88 = sphi 0, %s74
      %s94 = sphi 0, %s96
      %s97 = sphi 0, %s94
      %s98 = sphi 0, %s97
      %s114 = sphi 0, %s98
    $region4: #{tpu_custom_call.1} parent=1 // loop_header_branch
      %19 = sbr.rel (%p17) target = $region8
    $region5: #{tpu_custom_call.1} parent=1 // loop_body
      %s21 = ssub.s32 %s16, 1
      %s22 = ssub.s32 %s16, 2
      %s23 = sadd.s32 %s16, 1
      %s24 = ssub.s32 %s16, %s23
      %p25 = scmp.eq.s32.totalorder %s24, 0
      %s27 = sadd.s32 %s26, 1
      %s28 = scalar_select %p25, %s26, %s27
      %p31 = pneg %p25
      %p32 = scmp.eq.s32.totalorder %s16, 1
      %p33 = por %p31, %p32
      %p34 = scmp.ne.s32.totalorder %s26, %s29
      %p35 = scmp.eq.s32.totalorder %s16, 0
      %p36 = por %p34, %p35
      %p37 = scmp.ne.s32.totalorder %s26, %s29
      %p38 = scmp.eq.s32.totalorder %s21, 1
      %p39 = por %p37, %p38
      %p40 = scmp.ne.s32.totalorder %s29, %s30
      %p41 = scmp.eq.s32.totalorder %s21, 0
      %p42 = por %p40, %p41
      %p43 = scmp.ne.s32.totalorder %s29, %s30
      %p44 = scmp.eq.s32.totalorder %s22, 1
      %p45 = por %p43, %p44
      %p47 = scmp.ne.s32.totalorder %s30, %s46
      %p48 = scmp.eq.s32.totalorder %s22, 0
      %p49 = por %p47, %p48
      %s51 = sadd.s32 %s50, 1
      %p54 = scmp.eq.s32.totalorder %s16, 1
      %p55 = scmp.ne.s32.totalorder %s50, %s52
      %p56 = scmp.eq.s32.totalorder %s16, 0
      %p57 = por %p55, %p56
      %p58 = scmp.ne.s32.totalorder %s50, %s52
      %p59 = scmp.eq.s32.totalorder %s21, 1
      %p60 = por %p58, %p59
      %p61 = scmp.ne.s32.totalorder %s52, %s53
      %p62 = scmp.eq.s32.totalorder %s21, 0
      %p63 = por %p61, %p62
      %p64 = scmp.ne.s32.totalorder %s52, %s53
      %p65 = scmp.eq.s32.totalorder %s22, 1
      %p66 = por %p64, %p65
      %p68 = scmp.ne.s32.totalorder %s53, %s67
      %p69 = scmp.eq.s32.totalorder %s22, 0
      %p70 = por %p68, %p69
      %s72 = sadd.s32 %s71, 1
      %p75 = scmp.eq.s32.totalorder %s16, 1
      %p76 = scmp.ne.s32.totalorder %s71, %s73
      %p77 = scmp.eq.s32.totalorder %s16, 0
      %p78 = por %p76, %p77
      %p79 = scmp.ne.s32.totalorder %s71, %s73
      %p80 = scmp.eq.s32.totalorder %s21, 1
      %p81 = por %p79, %p80
      %p82 = scmp.ne.s32.totalorder %s73, %s74
      %p83 = scmp.eq.s32.totalorder %s21, 0
      %p84 = por %p82, %p83
      %p85 = scmp.ne.s32.totalorder %s73, %s74
      %p86 = scmp.eq.s32.totalorder %s22, 1
      %p87 = por %p85, %p86
      %p89 = scmp.ne.s32.totalorder %s74, %s88
      %p90 = scmp.eq.s32.totalorder %s22, 0
      %p91 = por %p89, %p90
      %s92 = ssub.s32 %s16, %s23
      %p93 = scmp.eq.s32.totalorder %s92, 0
      %s95 = sadd.s32 %s94, 1
      %s96 = scalar_select %p93, %s94, %s95
      %p99 = pneg %p93
      %p100 = scmp.eq.s32.totalorder %s16, 1
      %p101 = por %p99, %p100
      %p102 = scmp.ne.s32.totalorder %s94, %s97
      %p103 = scmp.eq.s32.totalorder %s16, 0
      %p104 = por %p102, %p103
      %p105 = scmp.ne.s32.totalorder %s94, %s97
      %p106 = scmp.eq.s32.totalorder %s21, 1
      %p107 = por %p105, %p106
      %p108 = scmp.ne.s32.totalorder %s97, %s98
      %p109 = scmp.eq.s32.totalorder %s21, 0
      %p110 = por %p108, %p109
      %p111 = scmp.ne.s32.totalorder %s97, %s98
      %p112 = scmp.eq.s32.totalorder %s22, 1
      %p113 = por %p111, %p112
      %p115 = scmp.ne.s32.totalorder %s98, %s114
      %p116 = scmp.eq.s32.totalorder %s22, 0
      %p117 = por %p115, %p116
      %p118 = scmp.le.s32.totalorder 1, %s16
      %p119 = scmp.lt.s32.totalorder %s16, 3
      %p120 = pnand %p118, %p119
      %p121 = pneg %p120
      // Predicated region
      $region9: #{tpu_custom_call.1} parent=5 // pred_check
        _
      $region10: #{tpu_custom_call.1} parent=5 // pred_check_branch
        %123 = sbr.rel (%p120) target = $region12
      $region11: #{tpu_custom_call.1} parent=5 // pred_region
        %s124 = ssub.s32 %s16, 1
        // Predicated region
        $region13: #{tpu_custom_call.1} parent=11 // pred_check
          %p125 = pneg %p63
        $region14: #{tpu_custom_call.1} parent=11 // pred_check_branch
          %127 = sbr.rel (%p125) target = $region16
        $region15: #{tpu_custom_call.1} parent=11 // pred_region
          %s129 = ssub.s32 3072, 3072
          %130 = vsyncadd [#allocation6], %s129
          %s131 = sshll.u32 [#allocation5], 4
          %s132 = int_to_ptr.vmem [resolvable:$true] %s131
          %137 = dma.hbm_to_vmem [thread:$0]  %s1, 3072, %s132, [#allocation6], 64, 64, 4
        $region16: #{tpu_custom_call.1} parent=11 // pred_fallthru
          _
        // Predicated region
        $region17: #{tpu_custom_call.1} parent=11 // pred_check
          %p138 = pneg %p84
        $region18: #{tpu_custom_call.1} parent=11 // pred_check_branch
          %140 = sbr.rel (%p138) target = $region20
        $region19: #{tpu_custom_call.1} parent=11 // pred_region
          _
        $region20: #{tpu_custom_call.1} parent=11 // pred_fallthru
          _
      $region12: #{tpu_custom_call.1} parent=5 // pred_fallthru
        _
      %p141 = scmp.lt.s32.totalorder %s16, 2
      // Predicated region
      $region21: #{tpu_custom_call.1} parent=5 // pred_check
        %p142 = pneg %p141
      $region22: #{tpu_custom_call.1} parent=5 // pred_check_branch
        %144 = sbr.rel (%p142) target = $region24
      $region23: #{tpu_custom_call.1} parent=5 // pred_region
        // Predicated region
        $region25: #{tpu_custom_call.1} parent=23 // pred_check
          %p145 = pneg %p36
        $region26: #{tpu_custom_call.1} parent=23 // pred_check_branch
          %147 = sbr.rel (%p145) target = $region28
        $region27: #{tpu_custom_call.1} parent=23 // pred_region
          %s148 = sand.u32 %s26, 1
          %s149 = scalar_lea.sflag [#allocation3], %s148
          %s150 = sand.u32 %s26, 1
          %s151 = smul.addr %s150, 8
          %s152 = scalar_lea.vmem [#allocation2], %s151
          %s154 = ssub.s32 128, 128
          %155 = vsyncadd %s149, %s154
          %s156 = smul.addr %s16, 128
          %s157 = scalar_lea.hbm %s0, %s156
          %s159 = sshll.u32 %s152, 4
          %s160 = int_to_ptr.vmem [resolvable:$true] %s159
          %162 = dma.hbm_to_vmem [thread:$0]  %s157, 128, %s160, %s149
        $region28: #{tpu_custom_call.1} parent=23 // pred_fallthru
          _
      $region24: #{tpu_custom_call.1} parent=5 // pred_fallthru
        _
      %p163 = scmp.le.s32.totalorder 1, %s16
      %p164 = scmp.lt.s32.totalorder %s16, 3
      %p165 = pnand %p163, %p164
      %p166 = pneg %p165
      // Predicated region
      $region29: #{tpu_custom_call.1} parent=5 // pred_check
        _
      $region30: #{tpu_custom_call.1} parent=5 // pred_check_branch
        %168 = sbr.rel (%p165) target = $region32
      $region31: #{tpu_custom_call.1} parent=5 // pred_region
        %s169 = ssub.s32 %s16, 1
        %s170 = sand.u32 %s29, 1
        %s171 = scalar_lea.sflag [#allocation3], %s170
        %s172 = sand.u32 %s29, 1
        %s173 = smul.addr %s172, 8
        %s174 = scalar_lea.vmem [#allocation2], %s173
        // Predicated region
        $region33: #{tpu_custom_call.1} parent=31 // pred_check
          %p175 = pneg %p42
        $region34: #{tpu_custom_call.1} parent=31 // pred_check_branch
          %177 = sbr.rel (%p175) target = $region36
        $region35: #{tpu_custom_call.1} parent=31 // pred_region
          %178 = dma.done %s171, 128
        $region36: #{tpu_custom_call.1} parent=31 // pred_fallthru
          _
        // Predicated region
        $region37: #{tpu_custom_call.1} parent=31 // pred_check
          %p179 = pneg %p63
        $region38: #{tpu_custom_call.1} parent=31 // pred_check_branch
          %181 = sbr.rel (%p179) target = $region40
        $region39: #{tpu_custom_call.1} parent=31 // pred_region
          %182 = dma.done [#allocation6], 3072
        $region40: #{tpu_custom_call.1} parent=31 // pred_fallthru
          _
        %s183 = sand.u32 %s29, 1
        %s184 = scalar_lea.sflag [#allocation3], %s183
        %s185 = sand.u32 %s29, 1
        %s186 = smul.addr %s185, 8
        %s187 = scalar_lea.vmem [#allocation2], %s186
        %p188 = pneg %p42
        %p189 = pneg %p39
        %p190 = pneg %p63
        %p191 = pneg %p60
        %p192 = pneg %p84
        %p193 = pneg %p81
        %p194 = pneg %p110
        %p195 = pneg %p107
        %s196 = sand.u32 %s97, 1
        %s197 = scalar_lea.sflag [#allocation4], %s196
        %s198 = sand.u32 %s97, 1
        %s199 = smul.addr %s198, 8
        %s200 = scalar_lea.vmem [#allocation7], %s199
        %v202 = vld [vmem:[%s174] sm:$0xff]
        %v203 = vpack.c.bf16 %v202, %v202
        %v204 = vld [vmem:[#allocation5] sm:$0xf]
        %v205 = vld [vmem:[#allocation5 + $0x4] sm:$0xf]
        %v206 = vld [vmem:[#allocation5 + $0x8] sm:$0xf]
        %v207 = vld [vmem:[#allocation5 + $0xc] sm:$0xf]
        %v208 = vld [vmem:[#allocation5 + $0x10] sm:$0xf]
        %v209 = vld [vmem:[#allocation5 + $0x14] sm:$0xf]
        %v210 = vld [vmem:[#allocation5 + $0x18] sm:$0xf]
        %v211 = vld [vmem:[#allocation5 + $0x1c] sm:$0xf]
        %v212 = vld [vmem:[#allocation5 + $0x20] sm:$0xf]
        %v213 = vld [vmem:[#allocation5 + $0x24] sm:$0xf]
        %v214 = vld [vmem:[#allocation5 + $0x28] sm:$0xf]
        %v215 = vld [vmem:[#allocation5 + $0x2c] sm:$0xf]
        %v216 = vld [vmem:[#allocation5 + $0x30] sm:$0xf]
        %v217 = vld [vmem:[#allocation5 + $0x34] sm:$0xf]
        %v218 = vld [vmem:[#allocation5 + $0x38] sm:$0xf]
        %v219 = vld [vmem:[#allocation5 + $0x3c] sm:$0xf]
        %v220 = vld [vmem:[%s2] sm:$0x1]
        %v222 = vlaneseq
        %v223 = vshrl.u32 %v222, 7
        %v224 = vsub.s32 0, %v223
        %v225 = vrot.slane %v220, %v224
        %v243 = vunpack.c.l.b16 %v204
        %v244 = vunpack.c.l.b16 %v205
        %v245 = vunpack.c.l.b16 %v206
        %v246 = vunpack.c.l.b16 %v207
        %v247 = vunpack.c.l.b16 %v208
        %v248 = vunpack.c.l.b16 %v209
        %v249 = vunpack.c.l.b16 %v210
        %v250 = vunpack.c.l.b16 %v211
        %v251 = vunpack.c.l.b16 %v212
        %v252 = vunpack.c.l.b16 %v213
        %v253 = vunpack.c.l.b16 %v214
        %v254 = vunpack.c.l.b16 %v215
        %v255 = vunpack.c.l.b16 %v216
        %v256 = vunpack.c.l.b16 %v217
        %v257 = vunpack.c.l.b16 %v218
        %v258 = vunpack.c.l.b16 %v219
        %v259 = vpack.c.b16 %v244, %v243
        %v260 = vpack.c.b16 %v246, %v245
        %v261 = vpack.c.b16 %v248, %v247
        %v262 = vpack.c.b16 %v250, %v249
        %v263 = vpack.c.b16 %v252, %v251
        %v264 = vpack.c.b16 %v254, %v253
        %v265 = vpack.c.b16 %v256, %v255
        %v266 = vpack.c.b16 %v258, %v257
        %275 = vmatprep.subr.bf16.mxu0 0
        %276 = vmatpush1.bf16.msra.mxu0 %v266
        %277 = vmatprep.subr.bf16.mxu0 0
        %278 = vmatpush1.bf16.msra.mxu0 %v265
        %279 = vmatprep.subr.bf16.mxu0 0
        %280 = vmatpush1.bf16.msra.mxu0 %v264
        %281 = vmatprep.subr.bf16.mxu0 0
        %282 = vmatpush1.bf16.msra.mxu0 %v263
        %283 = vmatprep.subr.bf16.mxu0 0
        %284 = vmatpush1.bf16.msra.mxu0 %v262
        %285 = vmatprep.subr.bf16.mxu0 0
        %286 = vmatpush1.bf16.msra.mxu0 %v261
        %287 = vmatprep.subr.bf16.mxu0 0
        %288 = vmatpush1.bf16.msra.mxu0 %v260
        %289 = vmatprep.subr.bf16.mxu0 0
        %290 = vmatpush1.bf16.msra.mxu0 %v259
        %291 = vmatprep.subr.bf16.mxu0 0
        %292 = vmatpush2.bf16.msra.mxu0 0
        %293 = vmatprep.subr.bf16.mxu0 0
        %294 = vmatpush2.bf16.msra.mxu0 0
        %295 = vmatprep.subr.bf16.mxu0 0
        %296 = vmatpush2.bf16.msra.mxu0 0
        %297 = vmatprep.subr.bf16.mxu0 0
        %298 = vmatpush2.bf16.msra.mxu0 0
        %299 = vmatprep.subr.bf16.mxu0 0
        %300 = vmatpush2.bf16.msra.mxu0 0
        %301 = vmatprep.subr.bf16.mxu0 0
        %302 = vmatpush2.bf16.msra.mxu0 0
        %303 = vmatprep.subr.bf16.mxu0 0
        %304 = vmatpush2.bf16.msra.mxu0 0
        %305 = vmatprep.subr.bf16.mxu0 0
        %306 = vmatpush2.bf16.msra.mxu0 0
        %307 = vmatprep.mubr.bf16.mxu0 0
        %308 = vmatmul.mubr.bf16.gmra.mxu0 %v203
        %v309 = vpop.f32.mrf.mxu0
        %v310 = vadd.f32 %v225, %v309
        %v311 = vpop.f32.mrf.mxu0
        %v312 = vpop.f32.mrf.mxu0
        %v313 = vpop.f32.mrf.mxu0
        %314 = vdwg.mxu0
        %v315 = vmax.f32 %v310, 0.0
        %v316 = vpack.c.bf16 %v315, %v315
        %s317 = scalar_lea.vmem [#allocation5], 64
        %v318 = vld [vmem:[%s317] sm:$0xf]
        %v319 = vld [vmem:[%s317 + $0x4] sm:$0xf]
        %v320 = vld [vmem:[%s317 + $0x8] sm:$0xf]
        %v321 = vld [vmem:[%s317 + $0xc] sm:$0xf]
        %v322 = vld [vmem:[%s317 + $0x10] sm:$0xf]
        %v323 = vld [vmem:[%s317 + $0x14] sm:$0xf]
        %v324 = vld [vmem:[%s317 + $0x18] sm:$0xf]
        %v325 = vld [vmem:[%s317 + $0x1c] sm:$0xf]
        %v326 = vld [vmem:[%s317 + $0x20] sm:$0xf]
        %v327 = vld [vmem:[%s317 + $0x24] sm:$0xf]
        %v328 = vld [vmem:[%s317 + $0x28] sm:$0xf]
        %v329 = vld [vmem:[%s317 + $0x2c] sm:$0xf]
        %v330 = vld [vmem:[%s317 + $0x30] sm:$0xf]
        %v331 = vld [vmem:[%s317 + $0x34] sm:$0xf]
        %v332 = vld [vmem:[%s317 + $0x38] sm:$0xf]
        %v333 = vld [vmem:[%s317 + $0x3c] sm:$0xf]
        %s334 = scalar_lea.vmem %s2, 1
        %v335 = vld [vmem:[%s334] sm:$0x1]
        %v337 = vlaneseq
        %v338 = vshrl.u32 %v337, 7
        %v339 = vsub.s32 0, %v338
        %v340 = vrot.slane %v335, %v339
        %v358 = vunpack.c.l.b16 %v318
        %v359 = vunpack.c.l.b16 %v319
        %v360 = vunpack.c.l.b16 %v320
        %v361 = vunpack.c.l.b16 %v321
        %v362 = vunpack.c.l.b16 %v322
        %v363 = vunpack.c.l.b16 %v323
        %v364 = vunpack.c.l.b16 %v324
        %v365 = vunpack.c.l.b16 %v325
        %v366 = vunpack.c.l.b16 %v326
        %v367 = vunpack.c.l.b16 %v327
        %v368 = vunpack.c.l.b16 %v328
        %v369 = vunpack.c.l.b16 %v329
        %v370 = vunpack.c.l.b16 %v330
        %v371 = vunpack.c.l.b16 %v331
        %v372 = vunpack.c.l.b16 %v332
        %v373 = vunpack.c.l.b16 %v333
        %v374 = vpack.c.b16 %v359, %v358
        %v375 = vpack.c.b16 %v361, %v360
        %v376 = vpack.c.b16 %v363, %v362
        %v377 = vpack.c.b16 %v365, %v364
        %v378 = vpack.c.b16 %v367, %v366
        %v379 = vpack.c.b16 %v369, %v368
        %v380 = vpack.c.b16 %v371, %v370
        %v381 = vpack.c.b16 %v373, %v372
        %390 = vmatprep.subr.bf16.mxu0 0
        %391 = vmatpush1.bf16.msra.mxu0 %v381
        %392 = vmatprep.subr.bf16.mxu0 0
        %393 = vmatpush1.bf16.msra.mxu0 %v380
        %394 = vmatprep.subr.bf16.mxu0 0
        %395 = vmatpush1.bf16.msra.mxu0 %v379
        %396 = vmatprep.subr.bf16.mxu0 0
        %397 = vmatpush1.bf16.msra.mxu0 %v378
        %398 = vmatprep.subr.bf16.mxu0 0
        %399 = vmatpush1.bf16.msra.mxu0 %v377
        %400 = vmatprep.subr.bf16.mxu0 0
        %401 = vmatpush1.bf16.msra.mxu0 %v376
        %402 = vmatprep.subr.bf16.mxu0 0
        %403 = vmatpush1.bf16.msra.mxu0 %v375
        %404 = vmatprep.subr.bf16.mxu0 0
        %405 = vmatpush1.bf16.msra.mxu0 %v374
        %406 = vmatprep.subr.bf16.mxu0 0
        %407 = vmatpush2.bf16.msra.mxu0 0
        %408 = vmatprep.subr.bf16.mxu0 0
        %409 = vmatpush2.bf16.msra.mxu0 0
        %410 = vmatprep.subr.bf16.mxu0 0
        %411 = vmatpush2.bf16.msra.mxu0 0
        %412 = vmatprep.subr.bf16.mxu0 0
        %413 = vmatpush2.bf16.msra.mxu0 0
        %414 = vmatprep.subr.bf16.mxu0 0
        %415 = vmatpush2.bf16.msra.mxu0 0
        %416 = vmatprep.subr.bf16.mxu0 0
        %417 = vmatpush2.bf16.msra.mxu0 0
        %418 = vmatprep.subr.bf16.mxu0 0
        %419 = vmatpush2.bf16.msra.mxu0 0
        %420 = vmatprep.subr.bf16.mxu0 0
        %421 = vmatpush2.bf16.msra.mxu0 0
        %422 = vmatprep.mubr.bf16.mxu0 0
        %423 = vmatmul.mubr.bf16.gmra.mxu0 %v316
        %v424 = vpop.f32.mrf.mxu0
        %v425 = vadd.f32 %v340, %v424
        %v426 = vpop.f32.mrf.mxu0
        %v427 = vpop.f32.mrf.mxu0
        %v428 = vpop.f32.mrf.mxu0
        %429 = vdwg.mxu0
        %v430 = vmax.f32 %v425, 0.0
        %v431 = vpack.c.bf16 %v430, %v430
        %s432 = scalar_lea.vmem [#allocation5], 128
        %v433 = vld [vmem:[%s432] sm:$0xf]
        %v434 = vld [vmem:[%s432 + $0x4] sm:$0xf]
        %v435 = vld [vmem:[%s432 + $0x8] sm:$0xf]
        %v436 = vld [vmem:[%s432 + $0xc] sm:$0xf]
        %v437 = vld [vmem:[%s432 + $0x10] sm:$0xf]
        %v438 = vld [vmem:[%s432 + $0x14] sm:$0xf]
        %v439 = vld [vmem:[%s432 + $0x18] sm:$0xf]
        %v440 = vld [vmem:[%s432 + $0x1c] sm:$0xf]
        %v441 = vld [vmem:[%s432 + $0x20] sm:$0xf]
        %v442 = vld [vmem:[%s432 + $0x24] sm:$0xf]
        %v443 = vld [vmem:[%s432 + $0x28] sm:$0xf]
        %v444 = vld [vmem:[%s432 + $0x2c] sm:$0xf]
        %v445 = vld [vmem:[%s432 + $0x30] sm:$0xf]
        %v446 = vld [vmem:[%s432 + $0x34] sm:$0xf]
        %v447 = vld [vmem:[%s432 + $0x38] sm:$0xf]
        %v448 = vld [vmem:[%s432 + $0x3c] sm:$0xf]
        %s449 = scalar_lea.vmem %s2, 2
        %v450 = vld [vmem:[%s449] sm:$0x1]
        %v452 = vlaneseq
        %v453 = vshrl.u32 %v452, 7
        %v454 = vsub.s32 0, %v453
        %v455 = vrot.slane %v450, %v454
        %v473 = vunpack.c.l.b16 %v433
        %v474 = vunpack.c.l.b16 %v434
        %v475 = vunpack.c.l.b16 %v435
        %v476 = vunpack.c.l.b16 %v436
        %v477 = vunpack.c.l.b16 %v437
        %v478 = vunpack.c.l.b16 %v438
        %v479 = vunpack.c.l.b16 %v439
        %v480 = vunpack.c.l.b16 %v440
        %v481 = vunpack.c.l.b16 %v441
        %v482 = vunpack.c.l.b16 %v442
        %v483 = vunpack.c.l.b16 %v443
        %v484 = vunpack.c.l.b16 %v444
        %v485 = vunpack.c.l.b16 %v445
        %v486 = vunpack.c.l.b16 %v446
        %v487 = vunpack.c.l.b16 %v447
        %v488 = vunpack.c.l.b16 %v448
        %v489 = vpack.c.b16 %v474, %v473
        %v490 = vpack.c.b16 %v476, %v475
        %v491 = vpack.c.b16 %v478, %v477
        %v492 = vpack.c.b16 %v480, %v479
        %v493 = vpack.c.b16 %v482, %v481
        %v494 = vpack.c.b16 %v484, %v483
        %v495 = vpack.c.b16 %v486, %v485
        %v496 = vpack.c.b16 %v488, %v487
        %505 = vmatprep.subr.bf16.mxu0 0
        %506 = vmatpush1.bf16.msra.mxu0 %v496
        %507 = vmatprep.subr.bf16.mxu0 0
        %508 = vmatpush1.bf16.msra.mxu0 %v495
        %509 = vmatprep.subr.bf16.mxu0 0
        %510 = vmatpush1.bf16.msra.mxu0 %v494
        %511 = vmatprep.subr.bf16.mxu0 0
        %512 = vmatpush1.bf16.msra.mxu0 %v493
        %513 = vmatprep.subr.bf16.mxu0 0
        %514 = vmatpush1.bf16.msra.mxu0 %v492
        %515 = vmatprep.subr.bf16.mxu0 0
        %516 = vmatpush1.bf16.msra.mxu0 %v491
        %517 = vmatprep.subr.bf16.mxu0 0
        %518 = vmatpush1.bf16.msra.mxu0 %v490
        %519 = vmatprep.subr.bf16.mxu0 0
        %520 = vmatpush1.bf16.msra.mxu0 %v489
        %521 = vmatprep.subr.bf16.mxu0 0
        %522 = vmatpush2.bf16.msra.mxu0 0
        %523 = vmatprep.subr.bf16.mxu0 0
        %524 = vmatpush2.bf16.msra.mxu0 0
        %525 = vmatprep.subr.bf16.mxu0 0
        %526 = vmatpush2.bf16.msra.mxu0 0
        %527 = vmatprep.subr.bf16.mxu0 0
        %528 = vmatpush2.bf16.msra.mxu0 0
        %529 = vmatprep.subr.bf16.mxu0 0
        %530 = vmatpush2.bf16.msra.mxu0 0
        %531 = vmatprep.subr.bf16.mxu0 0
        %532 = vmatpush2.bf16.msra.mxu0 0
        %533 = vmatprep.subr.bf16.mxu0 0
        %534 = vmatpush2.bf16.msra.mxu0 0
        %535 = vmatprep.subr.bf16.mxu0 0
        %536 = vmatpush2.bf16.msra.mxu0 0
        %537 = vmatprep.mubr.bf16.mxu0 0
        %538 = vmatmul.mubr.bf16.gmra.mxu0 %v431
        %v539 = vpop.f32.mrf.mxu0
        %v540 = vadd.f32 %v455, %v539
        %v541 = vpop.f32.mrf.mxu0
        %v542 = vpop.f32.mrf.mxu0
        %v543 = vpop.f32.mrf.mxu0
        %544 = vdwg.mxu0
        %545 = vst [vmem:[%s200] sm:$0xff] %v540
        %s546 = sand.u32 %s97, 1
        %s547 = scalar_lea.sflag [#allocation4], %s546
        %s548 = sand.u32 %s97, 1
        %s549 = smul.addr %s548, 8
        %s550 = scalar_lea.vmem [#allocation7], %s549
        // Predicated region
        $region41: #{tpu_custom_call.1} parent=31 // pred_check
          %p551 = pneg %p107
        $region42: #{tpu_custom_call.1} parent=31 // pred_check_branch
          %553 = sbr.rel (%p551) target = $region44
        $region43: #{tpu_custom_call.1} parent=31 // pred_region
          %s555 = ssub.s32 128, 128
          %556 = vsyncadd %s547, %s555
          %s557 = smul.addr %s21, 128
          %s558 = scalar_lea.hbm %s3, %s557
          %s560 = sshll.u32 %s550, 4
          %s561 = int_to_ptr.vmem [resolvable:$true] %s560
          %563 = dma.vmem_to_hbm [thread:$0]  %s561, 128, %s558, %s547
        $region44: #{tpu_custom_call.1} parent=31 // pred_fallthru
          _
      $region32: #{tpu_custom_call.1} parent=5 // pred_fallthru
        _
      %p564 = scmp.le.s32.totalorder 2, %s16
      // Predicated region
      $region45: #{tpu_custom_call.1} parent=5 // pred_check
        %p565 = pneg %p564
      $region46: #{tpu_custom_call.1} parent=5 // pred_check_branch
        %567 = sbr.rel (%p565) target = $region48
      $region47: #{tpu_custom_call.1} parent=5 // pred_region
        %s568 = ssub.s32 %s16, 2
        // Predicated region
        $region49: #{tpu_custom_call.1} parent=47 // pred_check
          %p569 = pneg %p113
        $region50: #{tpu_custom_call.1} parent=47 // pred_check_branch
          %571 = sbr.rel (%p569) target = $region52
        $region51: #{tpu_custom_call.1} parent=47 // pred_region
          %s572 = sand.u32 %s98, 1
          %s573 = scalar_lea.sflag [#allocation4], %s572
          %s574 = sand.u32 %s98, 1
          %s575 = smul.addr %s574, 8
          %s576 = scalar_lea.vmem [#allocation7], %s575
          %577 = dma.done %s573, 128
        $region52: #{tpu_custom_call.1} parent=47 // pred_fallthru
          _
      $region48: #{tpu_custom_call.1} parent=5 // pred_fallthru
        _
    $region6: #{tpu_custom_call.1} parent=1 // loop_footer
      %s20 = sadd.s32 1, %s16
    $region7: #{tpu_custom_call.1} parent=1 // loop_footer_branch
      %15 = sbr.rel target = $region3
    $region8: #{tpu_custom_call.1} parent=1 // loop_exit
      _
    %578 = vsyncpa [#allocation3], 1
    %s579 = scalar_lea.sflag [#allocation3], 1
    %580 = vsyncpa %s579, 1
    %581 = vsyncpa [#allocation6], 1
    %582 = vsyncpa [#allocation4], 1
    %s583 = scalar_lea.sflag [#allocation4], 1
    %584 = vsyncpa %s583, 1

</llo_original>
